<compile_context>
chip_gen: v7x
topology: tpu7x:2x2x1
jax: 0.10.0
libtpu: 0.0.40
codegen_flags: <defaults>
</compile_context>

<pallas_src>
import functools
import math

import jax
import jax.numpy as jnp
from jax.experimental import pallas as pl
from jax.experimental.pallas import tpu as pltpu


def _round_up(x, m):
    return (x + m - 1) // m * m


# ----------------------------------------------------------------------------
# Fused kernel: embed + merged conv + BN + ReLU + max-pool + FC + log-softmax
# ----------------------------------------------------------------------------
def fused_textcnn_kernel(ids_ref, emb_ref, convw_ref, sc_ref, sh_ref, thr_ref,
                         fcw_ref, fcb_ref, out_ref, *, window_sizes, tag_len):
    """One batch tile.

    ids:    (TB, L)          int32 token ids
    emb:    (Vp, E)          bf16 embedding table (rows zero-padded to Vp)
    convw:  (h_max*E, C)     bf16 merged im2col conv weight, C = n_w * F
    sc/sh:  (1, C)           f32 folded BN scale / shift (+ conv bias)
    thr:    (1, C)           int32 per-channel valid-time threshold (L - h + 1)
    fcw:    (C, TPAD)        bf16 FC weight, TPAD = 128-padded tag_len
    fcb:    (1, TPAD)        f32 FC bias (zero pad columns)
    out:    (TB, TPAD)       f32 log-softmax logits (lane-dense store)
    """
    h_max = max(window_sizes)
    tb, L = ids_ref.shape
    Vp, E = emb_ref.shape
    C = sc_ref.shape[1]
    n_rows = tb * L

    # ---- embedding gather as a one-hot MXU matmul (exact for 0/1 one-hot) ---
    ids = ids_ref[...]                                            # (TB, L) i32
    v_iota = jax.lax.broadcasted_iota(jnp.int32, (tb, L, Vp), 2)
    onehot = (v_iota == ids[:, :, None]).astype(jnp.bfloat16)     # (TB, L, Vp)
    x2 = jnp.dot(onehot.reshape(n_rows, Vp), emb_ref[...],
                 preferred_element_type=jnp.float32)              # (TB*L, E) f32

    # ---- shared im2col sublane rolls (k = 1 .. h_max-1), one bf16 cast ------
    # row (b*L + t), cols [k*E:(k+1)*E] hold x[b, t+k, :]; rows whose window
    # wraps past the sentence end are masked after the ReLU below.
    cols = [x2] + [pltpu.roll(x2, n_rows - k, axis=0) for k in range(1, h_max)]
    xi = jnp.concatenate(cols, axis=-1).astype(jnp.bfloat16)      # (TB*L, h_max*E)

    # ---- one merged conv dot for all branches + folded bias/BN + ReLU ------
    y = jnp.dot(xi, convw_ref[...],
                preferred_element_type=jnp.float32)               # (TB*L, C)
    y = jnp.maximum(y * sc_ref[...] + sh_ref[...], 0.0)

    # ---- single time-validity mask + MaxPool1d over time -------------------
    y = y.reshape(tb, L, C)
    t_iota = jax.lax.broadcasted_iota(jnp.int32, (1, L, C), 1)
    valid = t_iota < thr_ref[...][:, None, :]                     # (1, L, C)
    y = jnp.where(valid, y, 0.0)        # 0 is neutral post-ReLU
    feat = jnp.max(y, axis=1)                                     # (TB, C)

    # ---- FC + masked log-softmax (f32) --------------------------------------
    logits = jnp.dot(feat.astype(jnp.bfloat16), fcw_ref[...],
                     preferred_element_type=jnp.float32) + fcb_ref[...]
    tpad = fcb_ref.shape[1]
    c_idx = jax.lax.broadcasted_iota(jnp.int32, (tb, tpad), 1)
    logits = jnp.where(c_idx < tag_len, logits, -1e30)            # mask pad cols
    m = jnp.max(logits, axis=-1, keepdims=True)
    e = jnp.exp(logits - m)
    lse = m + jnp.log(jnp.sum(e, axis=-1, keepdims=True))
    out_ref[...] = logits - lse          # log_softmax(dim=1), lane-dense store


# ----------------------------------------------------------------------------
# Wrapper
# ----------------------------------------------------------------------------
@functools.partial(jax.jit, static_argnames=("window_sizes", "tag_len"))
def net_cnn_forward(s, params, *, window_sizes, tag_len):
    """Forward pass of Net_cnn. s: (B, L) int token ids."""
    s = s.astype(jnp.int32)
    B, L = s.shape
    emb = params["emb_bf16"]                      # (Vp, E) bf16
    Vp, E = emb.shape
    convw = params["conv_w_merged"]               # (h_max*E, C) bf16
    C = convw.shape[1]
    n_w = len(window_sizes)
    F_ = C // n_w
    h_max = max(window_sizes)
    tpad = params["fc_b"].shape[1]

    # Batch tiling: >= 2 grid steps when B > 8 (keeps both v7x TensorCores
    # busy), capped at 256 rows/step (per-step footprint stays a few MiB —
    # safe under v7x's 64 MiB VMEM and v5e's smaller scoped default).
    if B <= 8:
        TB = _round_up(max(B, 1), 8)
    else:
        TB = min(256, _round_up((B + 1) // 2, 8))
    Bp = _round_up(B, TB)
    s_p = jnp.pad(s, ((0, Bp - B), (0, 0)))       # padded rows sliced off below

    # Per-channel valid-time threshold (constant under jit).
    thr = jnp.concatenate(
        [jnp.full((F_,), L - h + 1, jnp.int32) for h in window_sizes]
    ).reshape(1, C)

    kern = functools.partial(fused_textcnn_kernel,
                             window_sizes=tuple(window_sizes), tag_len=tag_len)

    flops = 2 * Bp * L * (Vp * E + h_max * E * C) + 2 * Bp * C * tpad
    bytes_accessed = (Bp * L * 4 + Bp * tpad * 4 + Vp * E * 2
                      + h_max * E * C * 2 + C * tpad * 2 + 3 * C * 4 + tpad * 4)
    cost = pl.CostEstimate(flops=flops, transcendentals=Bp * tpad,
                           bytes_accessed=bytes_accessed)

    out = pl.pallas_call(
        kern,
        out_shape=jax.ShapeDtypeStruct((Bp, tpad), jnp.float32),
        grid=(Bp // TB,),
        in_specs=[
            pl.BlockSpec((TB, L), lambda b: (b, 0)),          # token ids
            pl.BlockSpec((Vp, E), lambda b: (0, 0)),          # embedding table
            pl.BlockSpec((h_max * E, C), lambda b: (0, 0)),   # merged conv W
            pl.BlockSpec((1, C), lambda b: (0, 0)),           # scales
            pl.BlockSpec((1, C), lambda b: (0, 0)),           # shifts
            pl.BlockSpec((1, C), lambda b: (0, 0)),           # time thresholds
            pl.BlockSpec((C, tpad), lambda b: (0, 0)),        # fc weight
            pl.BlockSpec((1, tpad), lambda b: (0, 0)),        # fc bias
        ],
        out_specs=pl.BlockSpec((TB, tpad), lambda b: (b, 0)),
        compiler_params=pltpu.CompilerParams(
            dimension_semantics=("parallel",),
            vmem_limit_bytes=48 * 1024 * 1024),
        cost_estimate=cost,
    )(s_p, emb, convw, params["scales"], params["shifts"], thr,
      params["fc_w"], params["fc_b"])

    return out[:B, :tag_len]


# ----------------------------------------------------------------------------
# Pure-JAX reference (f32 math over the same bf16-rounded weights)
# ----------------------------------------------------------------------------
def net_cnn_reference(s, params, *, window_sizes, tag_len):
    emb_tab = params["emb_bf16"].astype(jnp.float32)
    emb = emb_tab[s.astype(jnp.int32)]                           # (B, L, E)
    _, L, E = emb.shape
    n_w = len(window_sizes)
    Wm = params["conv_w_merged"].astype(jnp.float32)             # (h_max*E, C)
    C = Wm.shape[1]
    F_ = C // n_w
    sc = params["scales"].reshape(C)
    sh = params["shifts"].reshape(C)
    feats = []
    for bi, h in enumerate(window_sizes):
        w = Wm[:h * E, bi * F_:(bi + 1) * F_]                    # (h*E, F)
        T = L - h + 1
        xi = jnp.concatenate([emb[:, k:k + T, :] for k in range(h)], axis=-1)
        y = jnp.einsum("btk,kf->btf", xi, w)
        y = y * sc[bi * F_:(bi + 1) * F_] + sh[bi * F_:(bi + 1) * F_]
        y = jnp.maximum(y, 0.0)
        feats.append(jnp.max(y, axis=1))
    feat = jnp.concatenate(feats, axis=-1)
    logits = feat @ params["fc_w"].astype(jnp.float32) + params["fc_b"]
    return jax.nn.log_softmax(logits[:, :tag_len], axis=-1)


# ----------------------------------------------------------------------------
# Deterministic parameter construction (synthetic, not a checkpoint load)
# ----------------------------------------------------------------------------
def make_params(key, *, vocab_size, embedding_dim, sentence_length,
                feature_size, window_sizes, tag_len, padding_idx):
    del sentence_length  # not a parameter shape
    n_w = len(window_sizes)
    h_max = max(window_sizes)
    keys = jax.random.split(key, 3 + 2 * n_w)
    emb = 0.1 * jax.random.normal(keys[0], (vocab_size, embedding_dim),
                                  jnp.float32)
    emb = emb.at[padding_idx].set(0.0)             # nn.Embedding padding_idx row

    params = {"embedding": emb}
    Vp = _round_up(vocab_size, 8)
    emb_p = jnp.zeros((Vp, embedding_dim), jnp.float32).at[:vocab_size].set(emb)
    params["emb_bf16"] = emb_p.astype(jnp.bfloat16)              # (Vp, E)

    eps = 1e-5
    gamma = jnp.ones((feature_size,), jnp.float32)
    beta = jnp.zeros((feature_size,), jnp.float32)
    run_mean = jnp.zeros((feature_size,), jnp.float32)
    run_var = jnp.ones((feature_size,), jnp.float32)

    w_blocks, scales, shifts = [], [], []
    for i, h in enumerate(window_sizes):
        kw, kb = keys[1 + 2 * i], keys[2 + 2 * i]
        fan_in = embedding_dim * h
        w_torch = jax.random.normal(kw, (feature_size, embedding_dim, h),
                                    jnp.float32) / math.sqrt(fan_in)
        b = 0.01 * jax.random.normal(kb, (feature_size,), jnp.float32)
        scale = gamma / jnp.sqrt(run_var + eps)
        shift = beta - run_mean * scale + b * scale
        # torch (F, E, h) -> (h, E, F) -> im2col (h*E, F) -> zero-pad to h_max*E
        w_im2col = jnp.transpose(w_torch, (2, 1, 0)).reshape(
            h * embedding_dim, feature_size)
        w_pad = jnp.zeros((h_max * embedding_dim, feature_size),
                          jnp.float32).at[:h * embedding_dim].set(w_im2col)
        w_blocks.append(w_pad)
        scales.append(scale)
        shifts.append(shift)
    # Merged conv weight: (h_max*E, n_w*F) bf16 — one MXU dot for all branches.
    params["conv_w_merged"] = jnp.concatenate(w_blocks, axis=1).astype(jnp.bfloat16)
    params["scales"] = jnp.concatenate(scales).reshape(1, n_w * feature_size)
    params["shifts"] = jnp.concatenate(shifts).reshape(1, n_w * feature_size)

    D = feature_size * n_w
    tpad = _round_up(tag_len, 128)
    kfw, kfb = keys[-2], keys[-1]
    fc_w_torch = jax.random.normal(kfw, (tag_len, D), jnp.float32) / math.sqrt(D)
    fc_b = 0.01 * jax.random.normal(kfb, (tag_len,), jnp.float32)
    fc_w = jnp.zeros((D, tpad), jnp.float32).at[:, :tag_len].set(fc_w_torch.T)
    fc_bp = jnp.zeros((1, tpad), jnp.float32).at[0, :tag_len].set(fc_b)
    params["fc_w"] = fc_w.astype(jnp.bfloat16)                   # (D, 128)
    params["fc_b"] = fc_bp                                       # (1, 128)
    return params


# ----------------------------------------------------------------------------
# Demo
# ----------------------------------------------------------------------------
if __name__ == "__main__":
    # Small config consistent with the module's __init__.
    cfg = dict(vocab_size=50, embedding_dim=32, sentence_length=16,
               feature_size=32, window_sizes=(2, 3, 4), tag_len=8,
               padding_idx=0)
    B = 2

    key = jax.random.PRNGKey(0)
    kp, ks = jax.random.split(key)
    params = make_params(kp, **cfg)
    s = jax.random.randint(ks, (B, cfg["sentence_length"]), 0,
                           cfg["vocab_size"], dtype=jnp.int32)

    out = net_cnn_forward(s, params, window_sizes=cfg["window_sizes"],
                          tag_len=cfg["tag_len"])
    out = jax.block_until_ready(out)
    assert out.shape == (B, cfg["tag_len"])
    # log-softmax rows should sum (in prob space) to ~1
    assert bool(jnp.all(jnp.abs(jnp.sum(jnp.exp(out), axis=1) - 1.0) < 1e-4))
    # check against a pure-JAX reference (bf16 MXU operands -> loose tol)
    ref = net_cnn_reference(s, params, window_sizes=cfg["window_sizes"],
                            tag_len=cfg["tag_len"])
    assert bool(jnp.max(jnp.abs(out - ref)) < 3e-2)
    print("KERNEL_OK")
</pallas_src>

<mosaic_0001>
module attributes {stable_mosaic.version = 11 : i64} {
  func.func @fused_textcnn_kernel(%arg0: i32, %arg1: memref<8x16xi32, #tpu.memory_space<vmem>>, %arg2: memref<56x32xbf16, #tpu.memory_space<vmem>>, %arg3: memref<128x96xbf16, #tpu.memory_space<vmem>>, %arg4: memref<1x96xf32, #tpu.memory_space<vmem>>, %arg5: memref<1x96xf32, #tpu.memory_space<vmem>>, %arg6: memref<1x96xi32, #tpu.memory_space<vmem>>, %arg7: memref<96x128xbf16, #tpu.memory_space<vmem>>, %arg8: memref<1x128xf32, #tpu.memory_space<vmem>>, %arg9: memref<8x128xf32, #tpu.memory_space<vmem>>) attributes {dimension_semantics = [#tpu.dimension_semantics<parallel>], iteration_bounds = array<i64: 1>, scalar_prefetch = 0 : i64, scratch_operands = 0 : i64, tpu.core_type = #tpu.core_type<tc>, window_params = [{transform_indices = @transform_0, window_bounds = array<i64: 8, 16>}, {pipeline_mode = #tpu.pipeline_mode<synchronous>, transform_indices = @transform_1, window_bounds = array<i64: 56, 32>}, {pipeline_mode = #tpu.pipeline_mode<synchronous>, transform_indices = @transform_2, window_bounds = array<i64: 128, 96>}, {pipeline_mode = #tpu.pipeline_mode<synchronous>, transform_indices = @transform_3, window_bounds = array<i64: 1, 96>}, {pipeline_mode = #tpu.pipeline_mode<synchronous>, transform_indices = @transform_4, window_bounds = array<i64: 1, 96>}, {pipeline_mode = #tpu.pipeline_mode<synchronous>, transform_indices = @transform_5, window_bounds = array<i64: 1, 96>}, {pipeline_mode = #tpu.pipeline_mode<synchronous>, transform_indices = @transform_6, window_bounds = array<i64: 96, 128>}, {pipeline_mode = #tpu.pipeline_mode<synchronous>, transform_indices = @transform_7, window_bounds = array<i64: 1, 128>}, {transform_indices = @transform_8, window_bounds = array<i64: 8, 128>}]} {
    %c0 = arith.constant 0 : index
    %c0_0 = arith.constant 0 : index
    %0 = vector.load %arg1[%c0, %c0_0] : memref<8x16xi32, #tpu.memory_space<vmem>>, vector<8x16xi32>
    %1 = tpu.iota {dimensions = array<i32: 2>} : vector<8x16x56xi32>
    %2 = vector.shape_cast %0 : vector<8x16xi32> to vector<8x16x1xi32>
    %3 = vector.broadcast %2 : vector<8x16x1xi32> to vector<8x16x56xi32>
    %4 = arith.cmpi eq, %1, %3 : vector<8x16x56xi32>
    %5 = arith.extui %4 : vector<8x16x56xi1> to vector<8x16x56xi32>
    %6 = arith.sitofp %5 : vector<8x16x56xi32> to vector<8x16x56xf32>
    %7 = arith.truncf %6 : vector<8x16x56xf32> to vector<8x16x56xbf16>
    %8 = vector.shape_cast %7 : vector<8x16x56xbf16> to vector<128x56xbf16>
    %c0_1 = arith.constant 0 : index
    %c0_2 = arith.constant 0 : index
    %9 = vector.load %arg2[%c0_1, %c0_2] : memref<56x32xbf16, #tpu.memory_space<vmem>>, vector<56x32xbf16>
    %cst = arith.constant dense<0.000000e+00> : vector<128x32xf32>
    %10 = tpu.matmul %8, %9, %cst {dimension_numbers = #tpu.dot_dimension_numbers<[1], [0], [0], [1], [0, 0, 1, 1], [], []>} : vector<128x56xbf16>, vector<56x32xbf16>, vector<128x32xf32> -> vector<128x32xf32>
    %c127_i32 = arith.constant 127 : i32
    %11 = tpu.dynamic_rotate %10 by %c127_i32 dim 0 : vector<128x32xf32>, i32 -> vector<128x32xf32>
    %c126_i32 = arith.constant 126 : i32
    %12 = tpu.dynamic_rotate %10 by %c126_i32 dim 0 : vector<128x32xf32>, i32 -> vector<128x32xf32>
    %c125_i32 = arith.constant 125 : i32
    %13 = tpu.dynamic_rotate %10 by %c125_i32 dim 0 : vector<128x32xf32>, i32 -> vector<128x32xf32>
    %14 = tpu.concatenate %10, %11, %12, %13 in 1 : vector<128x32xf32>, vector<128x32xf32>, vector<128x32xf32>, vector<128x32xf32> -> vector<128x128xf32>
    %15 = arith.truncf %14 : vector<128x128xf32> to vector<128x128xbf16>
    %c0_3 = arith.constant 0 : index
    %c0_4 = arith.constant 0 : index
    %16 = vector.load %arg3[%c0_3, %c0_4] : memref<128x96xbf16, #tpu.memory_space<vmem>>, vector<128x96xbf16>
    %cst_5 = arith.constant dense<0.000000e+00> : vector<128x96xf32>
    %17 = tpu.matmul %15, %16, %cst_5 {dimension_numbers = #tpu.dot_dimension_numbers<[1], [0], [0], [1], [0, 0, 1, 1], [], []>} : vector<128x128xbf16>, vector<128x96xbf16>, vector<128x96xf32> -> vector<128x96xf32>
    %c0_6 = arith.constant 0 : index
    %c0_7 = arith.constant 0 : index
    %18 = vector.load %arg4[%c0_6, %c0_7] : memref<1x96xf32, #tpu.memory_space<vmem>>, vector<1x96xf32>
    %19 = vector.broadcast %18 : vector<1x96xf32> to vector<128x96xf32>
    %20 = arith.mulf %17, %19 : vector<128x96xf32>
    %c0_8 = arith.constant 0 : index
    %c0_9 = arith.constant 0 : index
    %21 = vector.load %arg5[%c0_8, %c0_9] : memref<1x96xf32, #tpu.memory_space<vmem>>, vector<1x96xf32>
    %22 = vector.broadcast %21 : vector<1x96xf32> to vector<128x96xf32>
    %23 = arith.addf %20, %22 : vector<128x96xf32>
    %cst_10 = arith.constant 0.000000e+00 : f32
    %24 = vector.broadcast %cst_10 : f32 to vector<128x96xf32>
    %25 = arith.maximumf %23, %24 : vector<128x96xf32>
    %26 = vector.shape_cast %25 : vector<128x96xf32> to vector<8x16x96xf32>
    %27 = tpu.iota {dimensions = array<i32: 1>} : vector<1x16x96xi32>
    %c0_11 = arith.constant 0 : index
    %c0_12 = arith.constant 0 : index
    %28 = vector.load %arg6[%c0_11, %c0_12] : memref<1x96xi32, #tpu.memory_space<vmem>>, vector<1x96xi32>
    %29 = vector.shape_cast %28 : vector<1x96xi32> to vector<1x1x96xi32>
    %30 = vector.broadcast %29 : vector<1x1x96xi32> to vector<1x16x96xi32>
    %31 = arith.cmpi slt, %27, %30 : vector<1x16x96xi32>
    %cst_13 = arith.constant 0.000000e+00 : f32
    %32 = vector.shape_cast %31 : vector<1x16x96xi1> to vector<1x16x96xi1>
    %33 = vector.broadcast %32 : vector<1x16x96xi1> to vector<8x16x96xi1>
    %34 = vector.broadcast %cst_13 : f32 to vector<8x16x96xf32>
    %35 = arith.select %33, %26, %34 : vector<8x16x96xi1>, vector<8x16x96xf32>
    %cst_14 = arith.constant dense<0xFF800000> : vector<8x96xf32>
    %36 = vector.multi_reduction <maximumf>, %35, %cst_14 [1] : vector<8x16x96xf32> to vector<8x96xf32>
    %37 = arith.truncf %36 : vector<8x96xf32> to vector<8x96xbf16>
    %c0_15 = arith.constant 0 : index
    %c0_16 = arith.constant 0 : index
    %38 = vector.load %arg7[%c0_15, %c0_16] : memref<96x128xbf16, #tpu.memory_space<vmem>>, vector<96x128xbf16>
    %cst_17 = arith.constant dense<0.000000e+00> : vector<8x128xf32>
    %39 = tpu.matmul %37, %38, %cst_17 {dimension_numbers = #tpu.dot_dimension_numbers<[1], [0], [0], [1], [0, 0, 1, 1], [], []>} : vector<8x96xbf16>, vector<96x128xbf16>, vector<8x128xf32> -> vector<8x128xf32>
    %c0_18 = arith.constant 0 : index
    %c0_19 = arith.constant 0 : index
    %40 = vector.load %arg8[%c0_18, %c0_19] : memref<1x128xf32, #tpu.memory_space<vmem>>, vector<1x128xf32>
    %41 = vector.broadcast %40 : vector<1x128xf32> to vector<8x128xf32>
    %42 = arith.addf %39, %41 : vector<8x128xf32>
    %43 = tpu.iota {dimensions = array<i32: 1>} : vector<8x128xi32>
    %c8_i32 = arith.constant 8 : i32
    %44 = vector.broadcast %c8_i32 : i32 to vector<8x128xi32>
    %45 = arith.cmpi slt, %43, %44 : vector<8x128xi32>
    %cst_20 = arith.constant -1.000000e+30 : f32
    %46 = vector.broadcast %cst_20 : f32 to vector<8x128xf32>
    %47 = arith.select %45, %42, %46 : vector<8x128xi1>, vector<8x128xf32>
    %cst_21 = arith.constant dense<0xFF800000> : vector<8xf32>
    %48 = vector.multi_reduction <maximumf>, %47, %cst_21 [1] : vector<8x128xf32> to vector<8xf32>
    %49 = vector.shape_cast %48 : vector<8xf32> to vector<8x1xf32>
    %50 = vector.broadcast %49 : vector<8x1xf32> to vector<8x128xf32>
    %51 = arith.subf %47, %50 : vector<8x128xf32>
    %52 = math.exp %51 : vector<8x128xf32>
    %cst_22 = arith.constant dense<0.000000e+00> : vector<8xf32>
    %53 = vector.multi_reduction <add>, %52, %cst_22 [1] : vector<8x128xf32> to vector<8xf32>
    %54 = vector.shape_cast %53 : vector<8xf32> to vector<8x1xf32>
    %55 = math.log %54 : vector<8x1xf32>
    %56 = arith.addf %49, %55 : vector<8x1xf32>
    %57 = vector.broadcast %56 : vector<8x1xf32> to vector<8x128xf32>
    %58 = arith.subf %47, %57 : vector<8x128xf32>
    %c0_23 = arith.constant 0 : index
    %c0_24 = arith.constant 0 : index
    %59 = vector.load %arg9[%c0_23, %c0_24] : memref<8x128xf32, #tpu.memory_space<vmem>>, vector<8x128xf32>
    tpu.vector_store %arg9[%c0_23, %c0_24], %58 {strides = array<i32>} : memref<8x128xf32, #tpu.memory_space<vmem>>, vector<8x128xf32>,
    return
  }
  func.func @transform_0(%arg0: i32) -> (i32, i32) {
    %c0_i32 = arith.constant 0 : i32
    %c0_i32_0 = arith.constant 0 : i32
    return %arg0, %c0_i32 : i32, i32
  }
  func.func @transform_1(%arg0: i32) -> (i32, i32) {
    %c0_i32 = arith.constant 0 : i32
    %c0_i32_0 = arith.constant 0 : i32
    %c0_i32_1 = arith.constant 0 : i32
    return %c0_i32, %c0_i32_0 : i32, i32
  }
  func.func @transform_2(%arg0: i32) -> (i32, i32) {
    %c0_i32 = arith.constant 0 : i32
    %c0_i32_0 = arith.constant 0 : i32
    %c0_i32_1 = arith.constant 0 : i32
    return %c0_i32, %c0_i32_0 : i32, i32
  }
  func.func @transform_3(%arg0: i32) -> (i32, i32) {
    %c0_i32 = arith.constant 0 : i32
    %c0_i32_0 = arith.constant 0 : i32
    %c0_i32_1 = arith.constant 0 : i32
    return %c0_i32, %c0_i32_0 : i32, i32
  }
  func.func @transform_4(%arg0: i32) -> (i32, i32) {
    %c0_i32 = arith.constant 0 : i32
    %c0_i32_0 = arith.constant 0 : i32
    %c0_i32_1 = arith.constant 0 : i32
    return %c0_i32, %c0_i32_0 : i32, i32
  }
  func.func @transform_5(%arg0: i32) -> (i32, i32) {
    %c0_i32 = arith.constant 0 : i32
    %c0_i32_0 = arith.constant 0 : i32
    %c0_i32_1 = arith.constant 0 : i32
    return %c0_i32, %c0_i32_0 : i32, i32
  }
  func.func @transform_6(%arg0: i32) -> (i32, i32) {
    %c0_i32 = arith.constant 0 : i32
    %c0_i32_0 = arith.constant 0 : i32
    %c0_i32_1 = arith.constant 0 : i32
    return %c0_i32, %c0_i32_0 : i32, i32
  }
  func.func @transform_7(%arg0: i32) -> (i32, i32) {
    %c0_i32 = arith.constant 0 : i32
    %c0_i32_0 = arith.constant 0 : i32
    %c0_i32_1 = arith.constant 0 : i32
    return %c0_i32, %c0_i32_0 : i32, i32
  }
  func.func @transform_8(%arg0: i32) -> (i32, i32) {
    %c0_i32 = arith.constant 0 : i32
    %c0_i32_0 = arith.constant 0 : i32
    return %arg0, %c0_i32 : i32, i32
  }
}

</mosaic_0001>

<llo_original>
// kernel: net_cnn_forward.1
$region0: #{net_cnn_forward.1}
  #allocation0 [shape = 'u32[]', space=smem, size = 0x4, offset = 0x4, fixed_abs, tag = 'smem constant byte address 0x4 - core index']
  #allocation1 [shape = 'u32[144,128]{1,0:T(1,128)}', space=vmem, size = 0x12000, scoped, tag = 'internal scratch']
  %s0 = inlined_call_operand.vmem [shape: s32[8,16], index: 0, kind: input, shape index: {}]
  %s1 = inlined_call_operand.vmem [shape: bf16[56,32], index: 1, kind: input, shape index: {}]
  %s2 = inlined_call_operand.vmem [shape: bf16[128,96], index: 2, kind: input, shape index: {}]
  %s3 = inlined_call_operand.vmem [shape: f32[1,96], index: 3, kind: input, shape index: {}]
  %s4 = inlined_call_operand.vmem [shape: f32[1,96], index: 4, kind: input, shape index: {}]
  %s5 = inlined_call_operand.vmem [shape: s32[1,96], index: 5, kind: input, shape index: {}]
  %s6 = inlined_call_operand.vmem [shape: bf16[96,128], index: 6, kind: input, shape index: {}]
  %s7 = inlined_call_operand.vmem [shape: f32[1,128], index: 7, kind: input, shape index: {}]
  %s8 = inlined_call_operand.vmem [shape: f32[8,128], index: 8, kind: output, shape index: {}]
  %s9 = sld [smem:[#allocation0]]
  $region42: #{net_cnn_forward.1} parent=0
    _
  %s11 = ssub.s32 1, %s9
  %s12 = scalar_select 0, %s11, %s9
  // Predicated region
  $region2: #{net_cnn_forward.1} parent=0 // pred_check
    _
  $region3: #{net_cnn_forward.1} parent=0 // pred_check_branch
    %14 = sbr.rel (0) target = $region5
  $region4: #{net_cnn_forward.1} parent=0 // pred_region
    _
  $region5: #{net_cnn_forward.1} parent=0 // pred_fallthru
    _
  // Predicated region
  $region6: #{net_cnn_forward.1} parent=0 // pred_check
    _
  $region7: #{net_cnn_forward.1} parent=0 // pred_check_branch
    %16 = sbr.rel (0) target = $region9
  $region8: #{net_cnn_forward.1} parent=0 // pred_region
    _
  $region9: #{net_cnn_forward.1} parent=0 // pred_fallthru
    _
  // Predicated region
  $region10: #{net_cnn_forward.1} parent=0 // pred_check
    _
  $region11: #{net_cnn_forward.1} parent=0 // pred_check_branch
    %18 = sbr.rel (0) target = $region13
  $region12: #{net_cnn_forward.1} parent=0 // pred_region
    _
  $region13: #{net_cnn_forward.1} parent=0 // pred_fallthru
    _
  // Predicated region
  $region14: #{net_cnn_forward.1} parent=0 // pred_check
    _
  $region15: #{net_cnn_forward.1} parent=0 // pred_check_branch
    %20 = sbr.rel (0) target = $region17
  $region16: #{net_cnn_forward.1} parent=0 // pred_region
    _
  $region17: #{net_cnn_forward.1} parent=0 // pred_fallthru
    _
  // Predicated region
  $region18: #{net_cnn_forward.1} parent=0 // pred_check
    _
  $region19: #{net_cnn_forward.1} parent=0 // pred_check_branch
    %22 = sbr.rel (0) target = $region21
  $region20: #{net_cnn_forward.1} parent=0 // pred_region
    _
  $region21: #{net_cnn_forward.1} parent=0 // pred_fallthru
    _
  // Predicated region
  $region22: #{net_cnn_forward.1} parent=0 // pred_check
    _
  $region23: #{net_cnn_forward.1} parent=0 // pred_check_branch
    %24 = sbr.rel (0) target = $region25
  $region24: #{net_cnn_forward.1} parent=0 // pred_region
    _
  $region25: #{net_cnn_forward.1} parent=0 // pred_fallthru
    _
  // Predicated region
  $region26: #{net_cnn_forward.1} parent=0 // pred_check
    _
  $region27: #{net_cnn_forward.1} parent=0 // pred_check_branch
    %26 = sbr.rel (0) target = $region29
  $region28: #{net_cnn_forward.1} parent=0 // pred_region
    _
  $region29: #{net_cnn_forward.1} parent=0 // pred_fallthru
    _
  // Predicated region
  $region30: #{net_cnn_forward.1} parent=0 // pred_check
    _
  $region31: #{net_cnn_forward.1} parent=0 // pred_check_branch
    %28 = sbr.rel (0) target = $region33
  $region32: #{net_cnn_forward.1} parent=0 // pred_region
    _
  $region33: #{net_cnn_forward.1} parent=0 // pred_fallthru
    _
  %v30 = vld [vmem:[%s0] sm:$0xff]
  %v31 = vlaneseq
  %v32 = vand.u32 %v31, 127
  %v33 = vlaneseq
  %v34 = vshrl.u32 %v33, 7
  %v35 = vsub.s32 0, %v34
  %v36 = vrot.slane %v30, %v35
  %38 = vbcast.lane.b32.xlu0 %v36, 256
  %v39 = vpop.permute.xlu0 %38
  %s41 = sor.u32 256, 8
  %42 = vbcast.lane.b32.xlu0 %v36, %s41
  %v43 = vpop.permute.xlu0 %42
  %v44 = vlaneseq
  %v45 = vshrl.u32 %v44, 7
  %v46 = vsub.s32 1, %v45
  %v47 = vrot.slane %v30, %v46
  %49 = vbcast.lane.b32.xlu0 %v47, 256
  %v50 = vpop.permute.xlu0 %49
  %s52 = sor.u32 256, 8
  %53 = vbcast.lane.b32.xlu0 %v47, %s52
  %v54 = vpop.permute.xlu0 %53
  %v55 = vlaneseq
  %v56 = vshrl.u32 %v55, 7
  %v57 = vsub.s32 2, %v56
  %v58 = vrot.slane %v30, %v57
  %60 = vbcast.lane.b32.xlu0 %v58, 256
  %v61 = vpop.permute.xlu0 %60
  %s63 = sor.u32 256, 8
  %64 = vbcast.lane.b32.xlu0 %v58, %s63
  %v65 = vpop.permute.xlu0 %64
  %v66 = vlaneseq
  %v67 = vshrl.u32 %v66, 7
  %v68 = vsub.s32 3, %v67
  %v69 = vrot.slane %v30, %v68
  %71 = vbcast.lane.b32.xlu0 %v69, 256
  %v72 = vpop.permute.xlu0 %71
  %s74 = sor.u32 256, 8
  %75 = vbcast.lane.b32.xlu0 %v69, %s74
  %v76 = vpop.permute.xlu0 %75
  %v77 = vlaneseq
  %v78 = vshrl.u32 %v77, 7
  %v79 = vsub.s32 4, %v78
  %v80 = vrot.slane %v30, %v79
  %82 = vbcast.lane.b32.xlu0 %v80, 256
  %v83 = vpop.permute.xlu0 %82
  %s85 = sor.u32 256, 8
  %86 = vbcast.lane.b32.xlu0 %v80, %s85
  %v87 = vpop.permute.xlu0 %86
  %v88 = vlaneseq
  %v89 = vshrl.u32 %v88, 7
  %v90 = vsub.s32 5, %v89
  %v91 = vrot.slane %v30, %v90
  %93 = vbcast.lane.b32.xlu0 %v91, 256
  %v94 = vpop.permute.xlu0 %93
  %s96 = sor.u32 256, 8
  %97 = vbcast.lane.b32.xlu0 %v91, %s96
  %v98 = vpop.permute.xlu0 %97
  %v99 = vlaneseq
  %v100 = vshrl.u32 %v99, 7
  %v101 = vsub.s32 6, %v100
  %v102 = vrot.slane %v30, %v101
  %104 = vbcast.lane.b32.xlu0 %v102, 256
  %v105 = vpop.permute.xlu0 %104
  %s107 = sor.u32 256, 8
  %108 = vbcast.lane.b32.xlu0 %v102, %s107
  %v109 = vpop.permute.xlu0 %108
  %v110 = vlaneseq
  %v111 = vshrl.u32 %v110, 7
  %v112 = vsub.s32 7, %v111
  %v113 = vrot.slane %v30, %v112
  %115 = vbcast.lane.b32.xlu0 %v113, 256
  %v116 = vpop.permute.xlu0 %115
  %s118 = sor.u32 256, 8
  %119 = vbcast.lane.b32.xlu0 %v113, %s118
  %v120 = vpop.permute.xlu0 %119
  %vm121 = vcmp.eq.s32.totalorder %v32, %v39
  %vm122 = vcmp.eq.s32.totalorder %v32, %v43
  %vm123 = vcmp.eq.s32.totalorder %v32, %v50
  %vm124 = vcmp.eq.s32.totalorder %v32, %v54
  %vm125 = vcmp.eq.s32.totalorder %v32, %v61
  %vm126 = vcmp.eq.s32.totalorder %v32, %v65
  %vm127 = vcmp.eq.s32.totalorder %v32, %v72
  %vm128 = vcmp.eq.s32.totalorder %v32, %v76
  %vm129 = vcmp.eq.s32.totalorder %v32, %v83
  %vm130 = vcmp.eq.s32.totalorder %v32, %v87
  %vm131 = vcmp.eq.s32.totalorder %v32, %v94
  %vm132 = vcmp.eq.s32.totalorder %v32, %v98
  %vm133 = vcmp.eq.s32.totalorder %v32, %v105
  %vm134 = vcmp.eq.s32.totalorder %v32, %v109
  %vm135 = vcmp.eq.s32.totalorder %v32, %v116
  %vm136 = vcmp.eq.s32.totalorder %v32, %v120
  %v137 = vsel %vm121, 1, 0
  %v138 = vsel %vm122, 1, 0
  %v139 = vsel %vm123, 1, 0
  %v140 = vsel %vm124, 1, 0
  %v141 = vsel %vm125, 1, 0
  %v142 = vsel %vm126, 1, 0
  %v143 = vsel %vm127, 1, 0
  %v144 = vsel %vm128, 1, 0
  %v145 = vsel %vm129, 1, 0
  %v146 = vsel %vm130, 1, 0
  %v147 = vsel %vm131, 1, 0
  %v148 = vsel %vm132, 1, 0
  %v149 = vsel %vm133, 1, 0
  %v150 = vsel %vm134, 1, 0
  %v151 = vsel %vm135, 1, 0
  %v152 = vsel %vm136, 1, 0
  %v153 = vcvt.s32.f32 %v137
  %v154 = vcvt.s32.f32 %v138
  %v155 = vcvt.s32.f32 %v139
  %v156 = vcvt.s32.f32 %v140
  %v157 = vcvt.s32.f32 %v141
  %v158 = vcvt.s32.f32 %v142
  %v159 = vcvt.s32.f32 %v143
  %v160 = vcvt.s32.f32 %v144
  %v161 = vcvt.s32.f32 %v145
  %v162 = vcvt.s32.f32 %v146
  %v163 = vcvt.s32.f32 %v147
  %v164 = vcvt.s32.f32 %v148
  %v165 = vcvt.s32.f32 %v149
  %v166 = vcvt.s32.f32 %v150
  %v167 = vcvt.s32.f32 %v151
  %v168 = vcvt.s32.f32 %v152
  %v169 = vpack.c.bf16 %v154, %v153
  %v170 = vpack.c.bf16 %v156, %v155
  %v171 = vpack.c.bf16 %v158, %v157
  %v172 = vpack.c.bf16 %v160, %v159
  %v173 = vpack.c.bf16 %v162, %v161
  %v174 = vpack.c.bf16 %v164, %v163
  %v175 = vpack.c.bf16 %v166, %v165
  %v176 = vpack.c.bf16 %v168, %v167
  %v177 = vld [vmem:[%s1] sm:$0xf]
  %v178 = vld [vmem:[%s1 + $0x4] sm:$0xf]
  %v179 = vld [vmem:[%s1 + $0x8] sm:$0xf]
  %v180 = vld [vmem:[%s1 + $0xc] sm:$0xf]
  %v181 = vld [vmem:[%s1 + $0x10] sm:$0xf]
  %v182 = vld [vmem:[%s1 + $0x14] sm:$0xf]
  %v183 = vld [vmem:[%s1 + $0x18] sm:$0xf]
  %v191 = vunpack.c.l.b16 %v177
  %v192 = vunpack.c.l.b16 %v178
  %v193 = vunpack.c.l.b16 %v179
  %v194 = vunpack.c.l.b16 %v180
  %v195 = vunpack.c.l.b16 %v181
  %v196 = vunpack.c.l.b16 %v182
  %v197 = vunpack.c.l.b16 %v183
  %v198 = vpack.c.b16 %v192, %v191
  %v199 = vpack.c.b16 %v194, %v193
  %v200 = vpack.c.b16 %v196, %v195
  %v201 = vpack.c.b16 %v197, %v197
  %vm205 = vcmask 457728
  %v207 = vsel %vm205, %v169, 0
  %v210 = vsel %vm205, %v170, 0
  %v213 = vsel %vm205, %v171, 0
  %v216 = vsel %vm205, %v172, 0
  %v219 = vsel %vm205, %v173, 0
  %v222 = vsel %vm205, %v174, 0
  %v225 = vsel %vm205, %v175, 0
  %v228 = vsel %vm205, %v176, 0
  %vm230 = vcmask 1043456
  %v232 = vsel %vm230, %v201, 0
  %234 = vmatprep.subr.bf16.mxu0 0
  %235 = vmatpush1.bf16.msra.mxu0 %v198
  %236 = vmatprep.subr.bf16.mxu0 0
  %237 = vmatpush1.bf16.msra.mxu0 %v199
  %238 = vmatprep.subr.bf16.mxu0 0
  %239 = vmatpush1.bf16.msra.mxu0 %v200
  %240 = vmatprep.subr.bf16.mxu0 0
  %241 = vmatpush1.bf16.msra.mxu0 %v232
  %242 = vmatprep.subr.bf16.mxu0 0
  %243 = vmatpush1.bf16.msra.mxu0 0
  %244 = vmatprep.subr.bf16.mxu0 0
  %245 = vmatpush1.bf16.msra.mxu0 0
  %246 = vmatprep.subr.bf16.mxu0 0
  %247 = vmatpush1.bf16.msra.mxu0 0
  %248 = vmatprep.subr.bf16.mxu0 0
  %249 = vmatpush1.bf16.msra.mxu0 0
  %250 = vmatprep.subr.bf16.mxu0 0
  %251 = vmatpush1.bf16.msra.mxu0 0
  %252 = vmatprep.subr.bf16.mxu0 0
  %253 = vmatpush1.bf16.msra.mxu0 0
  %254 = vmatprep.subr.bf16.mxu0 0
  %255 = vmatpush1.bf16.msra.mxu0 0
  %256 = vmatprep.subr.bf16.mxu0 0
  %257 = vmatpush1.bf16.msra.mxu0 0
  %258 = vmatprep.subr.bf16.mxu0 0
  %259 = vmatpush1.bf16.msra.mxu0 0
  %260 = vmatprep.subr.bf16.mxu0 0
  %261 = vmatpush1.bf16.msra.mxu0 0
  %262 = vmatprep.subr.bf16.mxu0 0
  %263 = vmatpush1.bf16.msra.mxu0 0
  %264 = vmatprep.subr.bf16.mxu0 0
  %265 = vmatpush1.bf16.msra.mxu0 0
  %266 = vmatprep.mubr.bf16.mxu0 0
  %267 = vmatmul.mubr.bf16.gmra.mrb[0].mxu0 %v207
  %v268 = vpop.f32.mrb[0].mxu0
  %v269 = vadd.f32 0.0, %v268
  %v270 = vpop.f32.mrb[0].mxu0
  %v271 = vpop.f32.mrb[0].mxu0
  %v272 = vadd.f32 0.0, %v271
  %v273 = vpop.f32.mrb[0].mxu0
  %274 = vmatprep.mubr.bf16.mxu0 0
  %275 = vmatmul.mubr.bf16.gmra.mrb[0].mxu0 %v210
  %v276 = vpop.f32.mrb[0].mxu0
  %v277 = vadd.f32 0.0, %v276
  %v278 = vpop.f32.mrb[0].mxu0
  %v279 = vpop.f32.mrb[0].mxu0
  %v280 = vadd.f32 0.0, %v279
  %v281 = vpop.f32.mrb[0].mxu0
  %282 = vmatprep.mubr.bf16.mxu0 0
  %283 = vmatmul.mubr.bf16.gmra.mrb[0].mxu0 %v213
  %v284 = vpop.f32.mrb[0].mxu0
  %v285 = vadd.f32 0.0, %v284
  %v286 = vpop.f32.mrb[0].mxu0
  %v287 = vpop.f32.mrb[0].mxu0
  %v288 = vadd.f32 0.0, %v287
  %v289 = vpop.f32.mrb[0].mxu0
  %290 = vmatprep.mubr.bf16.mxu0 0
  %291 = vmatmul.mubr.bf16.gmra.mrb[0].mxu0 %v216
  %v292 = vpop.f32.mrb[0].mxu0
  %v293 = vadd.f32 0.0, %v292
  %v294 = vpop.f32.mrb[0].mxu0
  %v295 = vpop.f32.mrb[0].mxu0
  %v296 = vadd.f32 0.0, %v295
  %v297 = vpop.f32.mrb[0].mxu0
  %298 = vmatprep.mubr.bf16.mxu0 0
  %299 = vmatmul.mubr.bf16.gmra.mrb[0].mxu0 %v219
  %v300 = vpop.f32.mrb[0].mxu0
  %v301 = vadd.f32 0.0, %v300
  %v302 = vpop.f32.mrb[0].mxu0
  %v303 = vpop.f32.mrb[0].mxu0
  %v304 = vadd.f32 0.0, %v303
  %v305 = vpop.f32.mrb[0].mxu0
  %306 = vmatprep.mubr.bf16.mxu0 0
  %307 = vmatmul.mubr.bf16.gmra.mrb[0].mxu0 %v222
  %v308 = vpop.f32.mrb[0].mxu0
  %v309 = vadd.f32 0.0, %v308
  %v310 = vpop.f32.mrb[0].mxu0
  %v311 = vpop.f32.mrb[0].mxu0
  %v312 = vadd.f32 0.0, %v311
  %v313 = vpop.f32.mrb[0].mxu0
  %314 = vmatprep.mubr.bf16.mxu0 0
  %315 = vmatmul.mubr.bf16.gmra.mrb[0].mxu0 %v225
  %v316 = vpop.f32.mrb[0].mxu0
  %v317 = vadd.f32 0.0, %v316
  %v318 = vpop.f32.mrb[0].mxu0
  %v319 = vpop.f32.mrb[0].mxu0
  %v320 = vadd.f32 0.0, %v319
  %v321 = vpop.f32.mrb[0].mxu0
  %322 = vmatprep.mubr.bf16.mxu0 0
  %323 = vmatmul.mubr.bf16.gmra.mrb[0].mxu0 %v228
  %v324 = vpop.f32.mrb[0].mxu0
  %v325 = vadd.f32 0.0, %v324
  %v326 = vpop.f32.mrb[0].mxu0
  %v327 = vpop.f32.mrb[0].mxu0
  %v328 = vadd.f32 0.0, %v327
  %v329 = vpop.f32.mrb[0].mxu0
  %330 = vdwg.mxu0
  %v331 = vrot.slane %v269, 1
  %v332 = vrot.slane %v272, 1
  %v333 = vrot.slane %v277, 1
  %v334 = vrot.slane %v280, 1
  %v335 = vrot.slane %v285, 1
  %v336 = vrot.slane %v288, 1
  %v337 = vrot.slane %v293, 1
  %v338 = vrot.slane %v296, 1
  %v339 = vrot.slane %v301, 1
  %v340 = vrot.slane %v304, 1
  %v341 = vrot.slane %v309, 1
  %v342 = vrot.slane %v312, 1
  %v343 = vrot.slane %v317, 1
  %v344 = vrot.slane %v320, 1
  %v345 = vrot.slane %v325, 1
  %v346 = vrot.slane %v328, 1
  %v347 = vlaneseq
  %v348 = vshrl.u32 %v347, 7
  %vm349 = vcmp.lt.s32.totalorder %v348, 7
  %v350 = vsel %vm349, %v345, %v346
  %v351 = vsel %vm349, %v344, %v345
  %v352 = vsel %vm349, %v343, %v344
  %v353 = vsel %vm349, %v342, %v343
  %v354 = vsel %vm349, %v341, %v342
  %v355 = vsel %vm349, %v340, %v341
  %v356 = vsel %vm349, %v339, %v340
  %v357 = vsel %vm349, %v338, %v339
  %v358 = vsel %vm349, %v337, %v338
  %v359 = vsel %vm349, %v336, %v337
  %v360 = vsel %vm349, %v335, %v336
  %v361 = vsel %vm349, %v334, %v335
  %v362 = vsel %vm349, %v333, %v334
  %v363 = vsel %vm349, %v332, %v333
  %v364 = vsel %vm349, %v331, %v332
  %v365 = vsel %vm349, %v346, %v331
  %v366 = vrot.slane %v269, 2
  %v367 = vrot.slane %v272, 2
  %v368 = vrot.slane %v277, 2
  %v369 = vrot.slane %v280, 2
  %v370 = vrot.slane %v285, 2
  %v371 = vrot.slane %v288, 2
  %v372 = vrot.slane %v293, 2
  %v373 = vrot.slane %v296, 2
  %v374 = vrot.slane %v301, 2
  %v375 = vrot.slane %v304, 2
  %v376 = vrot.slane %v309, 2
  %v377 = vrot.slane %v312, 2
  %v378 = vrot.slane %v317, 2
  %v379 = vrot.slane %v320, 2
  %v380 = vrot.slane %v325, 2
  %v381 = vrot.slane %v328, 2
  %vm382 = vcmp.lt.s32.totalorder %v348, 6
  %v383 = vsel %vm382, %v380, %v381
  %v384 = vsel %vm382, %v379, %v380
  %v385 = vsel %vm382, %v378, %v379
  %v386 = vsel %vm382, %v377, %v378
  %v387 = vsel %vm382, %v376, %v377
  %v388 = vsel %vm382, %v375, %v376
  %v389 = vsel %vm382, %v374, %v375
  %v390 = vsel %vm382, %v373, %v374
  %v391 = vsel %vm382, %v372, %v373
  %v392 = vsel %vm382, %v371, %v372
  %v393 = vsel %vm382, %v370, %v371
  %v394 = vsel %vm382, %v369, %v370
  %v395 = vsel %vm382, %v368, %v369
  %v396 = vsel %vm382, %v367, %v368
  %v397 = vsel %vm382, %v366, %v367
  %v398 = vsel %vm382, %v381, %v366
  %v399 = vrot.slane %v269, 3
  %v400 = vrot.slane %v272, 3
  %v401 = vrot.slane %v277, 3
  %v402 = vrot.slane %v280, 3
  %v403 = vrot.slane %v285, 3
  %v404 = vrot.slane %v288, 3
  %v405 = vrot.slane %v293, 3
  %v406 = vrot.slane %v296, 3
  %v407 = vrot.slane %v301, 3
  %v408 = vrot.slane %v304, 3
  %v409 = vrot.slane %v309, 3
  %v410 = vrot.slane %v312, 3
  %v411 = vrot.slane %v317, 3
  %v412 = vrot.slane %v320, 3
  %v413 = vrot.slane %v325, 3
  %v414 = vrot.slane %v328, 3
  %vm415 = vcmp.lt.s32.totalorder %v348, 5
  %v416 = vsel %vm415, %v413, %v414
  %v417 = vsel %vm415, %v412, %v413
  %v418 = vsel %vm415, %v411, %v412
  %v419 = vsel %vm415, %v410, %v411
  %v420 = vsel %vm415, %v409, %v410
  %v421 = vsel %vm415, %v408, %v409
  %v422 = vsel %vm415, %v407, %v408
  %v423 = vsel %vm415, %v406, %v407
  %v424 = vsel %vm415, %v405, %v406
  %v425 = vsel %vm415, %v404, %v405
  %v426 = vsel %vm415, %v403, %v404
  %v427 = vsel %vm415, %v402, %v403
  %v428 = vsel %vm415, %v401, %v402
  %v429 = vsel %vm415, %v400, %v401
  %v430 = vsel %vm415, %v399, %v400
  %v431 = vsel %vm415, %v414, %v399
  %448 = vrot.lane.b32.xlu0 %v364, 32
  %v449 = vpop.permute.xlu0 %448
  %450 = vrot.lane.b32.xlu0 %v363, 32
  %v451 = vpop.permute.xlu0 %450
  %452 = vrot.lane.b32.xlu0 %v362, 32
  %v453 = vpop.permute.xlu0 %452
  %454 = vrot.lane.b32.xlu0 %v361, 32
  %v455 = vpop.permute.xlu0 %454
  %456 = vrot.lane.b32.xlu0 %v360, 32
  %v457 = vpop.permute.xlu0 %456
  %458 = vrot.lane.b32.xlu0 %v359, 32
  %v459 = vpop.permute.xlu0 %458
  %460 = vrot.lane.b32.xlu0 %v358, 32
  %v461 = vpop.permute.xlu0 %460
  %462 = vrot.lane.b32.xlu0 %v357, 32
  %v463 = vpop.permute.xlu0 %462
  %464 = vrot.lane.b32.xlu0 %v356, 32
  %v465 = vpop.permute.xlu0 %464
  %466 = vrot.lane.b32.xlu0 %v355, 32
  %v467 = vpop.permute.xlu0 %466
  %468 = vrot.lane.b32.xlu0 %v354, 32
  %v469 = vpop.permute.xlu0 %468
  %470 = vrot.lane.b32.xlu0 %v353, 32
  %v471 = vpop.permute.xlu0 %470
  %472 = vrot.lane.b32.xlu0 %v352, 32
  %v473 = vpop.permute.xlu0 %472
  %474 = vrot.lane.b32.xlu0 %v351, 32
  %v475 = vpop.permute.xlu0 %474
  %476 = vrot.lane.b32.xlu0 %v350, 32
  %v477 = vpop.permute.xlu0 %476
  %478 = vrot.lane.b32.xlu0 %v365, 32
  %v479 = vpop.permute.xlu0 %478
  %512 = vrot.lane.b32.xlu0 %v397, 64
  %v513 = vpop.permute.xlu0 %512
  %514 = vrot.lane.b32.xlu0 %v396, 64
  %v515 = vpop.permute.xlu0 %514
  %516 = vrot.lane.b32.xlu0 %v395, 64
  %v517 = vpop.permute.xlu0 %516
  %518 = vrot.lane.b32.xlu0 %v394, 64
  %v519 = vpop.permute.xlu0 %518
  %520 = vrot.lane.b32.xlu0 %v393, 64
  %v521 = vpop.permute.xlu0 %520
  %522 = vrot.lane.b32.xlu0 %v392, 64
  %v523 = vpop.permute.xlu0 %522
  %524 = vrot.lane.b32.xlu0 %v391, 64
  %v525 = vpop.permute.xlu0 %524
  %526 = vrot.lane.b32.xlu0 %v390, 64
  %v527 = vpop.permute.xlu0 %526
  %528 = vrot.lane.b32.xlu0 %v389, 64
  %v529 = vpop.permute.xlu0 %528
  %530 = vrot.lane.b32.xlu0 %v388, 64
  %v531 = vpop.permute.xlu0 %530
  %532 = vrot.lane.b32.xlu0 %v387, 64
  %v533 = vpop.permute.xlu0 %532
  %534 = vrot.lane.b32.xlu0 %v386, 64
  %v535 = vpop.permute.xlu0 %534
  %536 = vrot.lane.b32.xlu0 %v385, 64
  %v537 = vpop.permute.xlu0 %536
  %538 = vrot.lane.b32.xlu0 %v384, 64
  %v539 = vpop.permute.xlu0 %538
  %540 = vrot.lane.b32.xlu0 %v383, 64
  %v541 = vpop.permute.xlu0 %540
  %542 = vrot.lane.b32.xlu0 %v398, 64
  %v543 = vpop.permute.xlu0 %542
  %576 = vrot.lane.b32.xlu0 %v430, 96
  %v577 = vpop.permute.xlu0 %576
  %578 = vrot.lane.b32.xlu0 %v429, 96
  %v579 = vpop.permute.xlu0 %578
  %580 = vrot.lane.b32.xlu0 %v428, 96
  %v581 = vpop.permute.xlu0 %580
  %582 = vrot.lane.b32.xlu0 %v427, 96
  %v583 = vpop.permute.xlu0 %582
  %584 = vrot.lane.b32.xlu0 %v426, 96
  %v585 = vpop.permute.xlu0 %584
  %586 = vrot.lane.b32.xlu0 %v425, 96
  %v587 = vpop.permute.xlu0 %586
  %588 = vrot.lane.b32.xlu0 %v424, 96
  %v589 = vpop.permute.xlu0 %588
  %590 = vrot.lane.b32.xlu0 %v423, 96
  %v591 = vpop.permute.xlu0 %590
  %592 = vrot.lane.b32.xlu0 %v422, 96
  %v593 = vpop.permute.xlu0 %592
  %594 = vrot.lane.b32.xlu0 %v421, 96
  %v595 = vpop.permute.xlu0 %594
  %596 = vrot.lane.b32.xlu0 %v420, 96
  %v597 = vpop.permute.xlu0 %596
  %598 = vrot.lane.b32.xlu0 %v419, 96
  %v599 = vpop.permute.xlu0 %598
  %600 = vrot.lane.b32.xlu0 %v418, 96
  %v601 = vpop.permute.xlu0 %600
  %602 = vrot.lane.b32.xlu0 %v417, 96
  %v603 = vpop.permute.xlu0 %602
  %604 = vrot.lane.b32.xlu0 %v416, 96
  %v605 = vpop.permute.xlu0 %604
  %606 = vrot.lane.b32.xlu0 %v431, 96
  %v607 = vpop.permute.xlu0 %606
  %vm624 = vcmask 261120
  %v625 = vsel %vm624, %v269, %v449
  %v626 = vsel %vm624, %v272, %v451
  %v627 = vsel %vm624, %v277, %v453
  %v628 = vsel %vm624, %v280, %v455
  %v629 = vsel %vm624, %v285, %v457
  %v630 = vsel %vm624, %v288, %v459
  %v631 = vsel %vm624, %v293, %v461
  %v632 = vsel %vm624, %v296, %v463
  %v633 = vsel %vm624, %v301, %v465
  %v634 = vsel %vm624, %v304, %v467
  %v635 = vsel %vm624, %v309, %v469
  %v636 = vsel %vm624, %v312, %v471
  %v637 = vsel %vm624, %v317, %v473
  %v638 = vsel %vm624, %v320, %v475
  %v639 = vsel %vm624, %v325, %v477
  %v640 = vsel %vm624, %v328, %v479
  %vm641 = vcmask 523264
  %v642 = vsel %vm641, %v625, %v513
  %v643 = vsel %vm641, %v626, %v515
  %v644 = vsel %vm641, %v627, %v517
  %v645 = vsel %vm641, %v628, %v519
  %v646 = vsel %vm641, %v629, %v521
  %v647 = vsel %vm641, %v630, %v523
  %v648 = vsel %vm641, %v631, %v525
  %v649 = vsel %vm641, %v632, %v527
  %v650 = vsel %vm641, %v633, %v529
  %v651 = vsel %vm641, %v634, %v531
  %v652 = vsel %vm641, %v635, %v533
  %v653 = vsel %vm641, %v636, %v535
  %v654 = vsel %vm641, %v637, %v537
  %v655 = vsel %vm641, %v638, %v539
  %v656 = vsel %vm641, %v639, %v541
  %v657 = vsel %vm641, %v640, %v543
  %vm658 = vcmask 785408
  %v659 = vsel %vm658, %v642, %v577
  %v660 = vsel %vm658, %v643, %v579
  %v661 = vsel %vm658, %v644, %v581
  %v662 = vsel %vm658, %v645, %v583
  %v663 = vsel %vm658, %v646, %v585
  %v664 = vsel %vm658, %v647, %v587
  %v665 = vsel %vm658, %v648, %v589
  %v666 = vsel %vm658, %v649, %v591
  %v667 = vsel %vm658, %v650, %v593
  %v668 = vsel %vm658, %v651, %v595
  %v669 = vsel %vm658, %v652, %v597
  %v670 = vsel %vm658, %v653, %v599
  %v671 = vsel %vm658, %v654, %v601
  %v672 = vsel %vm658, %v655, %v603
  %v673 = vsel %vm658, %v656, %v605
  %v674 = vsel %vm658, %v657, %v607
  %v675 = vpack.c.bf16 %v660, %v659
  %v676 = vpack.c.bf16 %v662, %v661
  %v677 = vpack.c.bf16 %v664, %v663
  %v678 = vpack.c.bf16 %v666, %v665
  %v679 = vpack.c.bf16 %v668, %v667
  %v680 = vpack.c.bf16 %v670, %v669
  %v681 = vpack.c.bf16 %v672, %v671
  %v682 = vpack.c.bf16 %v674, %v673
  %v683 = vld [vmem:[%s2] sm:$0xf]
  %v684 = vld [vmem:[%s2 + $0x4] sm:$0xf]
  %v685 = vld [vmem:[%s2 + $0x8] sm:$0xf]
  %v686 = vld [vmem:[%s2 + $0xc] sm:$0xf]
  %v687 = vld [vmem:[%s2 + $0x10] sm:$0xf]
  %v688 = vld [vmem:[%s2 + $0x14] sm:$0xf]
  %v689 = vld [vmem:[%s2 + $0x18] sm:$0xf]
  %v690 = vld [vmem:[%s2 + $0x1c] sm:$0xf]
  %v691 = vld [vmem:[%s2 + $0x20] sm:$0xf]
  %v692 = vld [vmem:[%s2 + $0x24] sm:$0xf]
  %v693 = vld [vmem:[%s2 + $0x28] sm:$0xf]
  %v694 = vld [vmem:[%s2 + $0x2c] sm:$0xf]
  %v695 = vld [vmem:[%s2 + $0x30] sm:$0xf]
  %v696 = vld [vmem:[%s2 + $0x34] sm:$0xf]
  %v697 = vld [vmem:[%s2 + $0x38] sm:$0xf]
  %v698 = vld [vmem:[%s2 + $0x3c] sm:$0xf]
  %v715 = vunpack.c.l.b16 %v683
  %v716 = vunpack.c.l.b16 %v684
  %v717 = vunpack.c.l.b16 %v685
  %v718 = vunpack.c.l.b16 %v686
  %v719 = vunpack.c.l.b16 %v687
  %v720 = vunpack.c.l.b16 %v688
  %v721 = vunpack.c.l.b16 %v689
  %v722 = vunpack.c.l.b16 %v690
  %v723 = vunpack.c.l.b16 %v691
  %v724 = vunpack.c.l.b16 %v692
  %v725 = vunpack.c.l.b16 %v693
  %v726 = vunpack.c.l.b16 %v694
  %v727 = vunpack.c.l.b16 %v695
  %v728 = vunpack.c.l.b16 %v696
  %v729 = vunpack.c.l.b16 %v697
  %v730 = vunpack.c.l.b16 %v698
  %v731 = vpack.c.b16 %v716, %v715
  %v732 = vpack.c.b16 %v718, %v717
  %v733 = vpack.c.b16 %v720, %v719
  %v734 = vpack.c.b16 %v722, %v721
  %v735 = vpack.c.b16 %v724, %v723
  %v736 = vpack.c.b16 %v726, %v725
  %v737 = vpack.c.b16 %v728, %v727
  %v738 = vpack.c.b16 %v730, %v729
  %747 = vmatprep.subr.bf16.mxu0 0
  %748 = vmatpush1.bf16.msra.mxu0 %v731
  %749 = vmatprep.subr.bf16.mxu0 0
  %750 = vmatpush1.bf16.msra.mxu0 %v732
  %751 = vmatprep.subr.bf16.mxu0 0
  %752 = vmatpush1.bf16.msra.mxu0 %v733
  %753 = vmatprep.subr.bf16.mxu0 0
  %754 = vmatpush1.bf16.msra.mxu0 %v734
  %755 = vmatprep.subr.bf16.mxu0 0
  %756 = vmatpush1.bf16.msra.mxu0 %v735
  %757 = vmatprep.subr.bf16.mxu0 0
  %758 = vmatpush1.bf16.msra.mxu0 %v736
  %759 = vmatprep.subr.bf16.mxu0 0
  %760 = vmatpush1.bf16.msra.mxu0 %v737
  %761 = vmatprep.subr.bf16.mxu0 0
  %762 = vmatpush1.bf16.msra.mxu0 %v738
  %763 = vmatprep.subr.bf16.mxu0 0
  %764 = vmatpush1.bf16.msra.mxu0 0
  %765 = vmatprep.subr.bf16.mxu0 0
  %766 = vmatpush1.bf16.msra.mxu0 0
  %767 = vmatprep.subr.bf16.mxu0 0
  %768 = vmatpush1.bf16.msra.mxu0 0
  %769 = vmatprep.subr.bf16.mxu0 0
  %770 = vmatpush1.bf16.msra.mxu0 0
  %771 = vmatprep.subr.bf16.mxu0 0
  %772 = vmatpush1.bf16.msra.mxu0 0
  %773 = vmatprep.subr.bf16.mxu0 0
  %774 = vmatpush1.bf16.msra.mxu0 0
  %775 = vmatprep.subr.bf16.mxu0 0
  %776 = vmatpush1.bf16.msra.mxu0 0
  %777 = vmatprep.subr.bf16.mxu0 0
  %778 = vmatpush1.bf16.msra.mxu0 0
  %779 = vmatprep.mubr.bf16.mxu0 0
  %780 = vmatmul.mubr.bf16.gmra.mrb[0].mxu0 %v675
  %v781 = vpop.f32.mrb[0].mxu0
  %v782 = vadd.f32 0.0, %v781
  %v783 = vpop.f32.mrb[0].mxu0
  %v784 = vpop.f32.mrb[0].mxu0
  %v785 = vadd.f32 0.0, %v784
  %v786 = vpop.f32.mrb[0].mxu0
  %787 = vmatprep.mubr.bf16.mxu0 0
  %788 = vmatmul.mubr.bf16.gmra.mrb[0].mxu0 %v676
  %v789 = vpop.f32.mrb[0].mxu0
  %v790 = vadd.f32 0.0, %v789
  %v791 = vpop.f32.mrb[0].mxu0
  %v792 = vpop.f32.mrb[0].mxu0
  %v793 = vadd.f32 0.0, %v792
  %v794 = vpop.f32.mrb[0].mxu0
  %795 = vmatprep.mubr.bf16.mxu0 0
  %796 = vmatmul.mubr.bf16.gmra.mrb[0].mxu0 %v677
  %v797 = vpop.f32.mrb[0].mxu0
  %v798 = vadd.f32 0.0, %v797
  %v799 = vpop.f32.mrb[0].mxu0
  %v800 = vpop.f32.mrb[0].mxu0
  %v801 = vadd.f32 0.0, %v800
  %v802 = vpop.f32.mrb[0].mxu0
  %803 = vmatprep.mubr.bf16.mxu0 0
  %804 = vmatmul.mubr.bf16.gmra.mrb[0].mxu0 %v678
  %v805 = vpop.f32.mrb[0].mxu0
  %v806 = vadd.f32 0.0, %v805
  %v807 = vpop.f32.mrb[0].mxu0
  %v808 = vpop.f32.mrb[0].mxu0
  %v809 = vadd.f32 0.0, %v808
  %v810 = vpop.f32.mrb[0].mxu0
  %811 = vmatprep.mubr.bf16.mxu0 0
  %812 = vmatmul.mubr.bf16.gmra.mrb[0].mxu0 %v679
  %v813 = vpop.f32.mrb[0].mxu0
  %v814 = vadd.f32 0.0, %v813
  %v815 = vpop.f32.mrb[0].mxu0
  %v816 = vpop.f32.mrb[0].mxu0
  %v817 = vadd.f32 0.0, %v816
  %v818 = vpop.f32.mrb[0].mxu0
  %819 = vmatprep.mubr.bf16.mxu0 0
  %820 = vmatmul.mubr.bf16.gmra.mrb[0].mxu0 %v680
  %v821 = vpop.f32.mrb[0].mxu0
  %v822 = vadd.f32 0.0, %v821
  %v823 = vpop.f32.mrb[0].mxu0
  %v824 = vpop.f32.mrb[0].mxu0
  %v825 = vadd.f32 0.0, %v824
  %v826 = vpop.f32.mrb[0].mxu0
  %827 = vmatprep.mubr.bf16.mxu0 0
  %828 = vmatmul.mubr.bf16.gmra.mrb[0].mxu0 %v681
  %v829 = vpop.f32.mrb[0].mxu0
  %v830 = vadd.f32 0.0, %v829
  %v831 = vpop.f32.mrb[0].mxu0
  %v832 = vpop.f32.mrb[0].mxu0
  %v833 = vadd.f32 0.0, %v832
  %v834 = vpop.f32.mrb[0].mxu0
  %835 = vmatprep.mubr.bf16.mxu0 0
  %836 = vmatmul.mubr.bf16.gmra.mrb[0].mxu0 %v682
  %v837 = vpop.f32.mrb[0].mxu0
  %v838 = vadd.f32 0.0, %v837
  %v839 = vpop.f32.mrb[0].mxu0
  %v840 = vpop.f32.mrb[0].mxu0
  %v841 = vadd.f32 0.0, %v840
  %v842 = vpop.f32.mrb[0].mxu0
  %843 = vdwg.mxu0
  %v844 = vld [vmem:[%s3] sm:$0x1]
  %v846 = vlaneseq
  %v847 = vshrl.u32 %v846, 7
  %v848 = vsub.s32 0, %v847
  %v849 = vrot.slane %v844, %v848
  %v851 = vmul.f32 %v782, %v849
  %v852 = vmul.f32 %v785, %v849
  %v853 = vmul.f32 %v790, %v849
  %v854 = vmul.f32 %v793, %v849
  %v855 = vmul.f32 %v798, %v849
  %v856 = vmul.f32 %v801, %v849
  %v857 = vmul.f32 %v806, %v849
  %v858 = vmul.f32 %v809, %v849
  %v859 = vmul.f32 %v814, %v849
  %v860 = vmul.f32 %v817, %v849
  %v861 = vmul.f32 %v822, %v849
  %v862 = vmul.f32 %v825, %v849
  %v863 = vmul.f32 %v830, %v849
  %v864 = vmul.f32 %v833, %v849
  %v865 = vmul.f32 %v838, %v849
  %v866 = vmul.f32 %v841, %v849
  %v867 = vld [vmem:[%s4] sm:$0x1]
  %v869 = vlaneseq
  %v870 = vshrl.u32 %v869, 7
  %v871 = vsub.s32 0, %v870
  %v872 = vrot.slane %v867, %v871
  %v874 = vadd.f32 %v851, %v872
  %v875 = vadd.f32 %v852, %v872
  %v876 = vadd.f32 %v853, %v872
  %v877 = vadd.f32 %v854, %v872
  %v878 = vadd.f32 %v855, %v872
  %v879 = vadd.f32 %v856, %v872
  %v880 = vadd.f32 %v857, %v872
  %v881 = vadd.f32 %v858, %v872
  %v882 = vadd.f32 %v859, %v872
  %v883 = vadd.f32 %v860, %v872
  %v884 = vadd.f32 %v861, %v872
  %v885 = vadd.f32 %v862, %v872
  %v886 = vadd.f32 %v863, %v872
  %v887 = vadd.f32 %v864, %v872
  %v888 = vadd.f32 %v865, %v872
  %v889 = vadd.f32 %v866, %v872
  %v890 = vmax.f32 %v874, 0.0
  %v891 = vmax.f32 %v875, 0.0
  %v892 = vmax.f32 %v876, 0.0
  %v893 = vmax.f32 %v877, 0.0
  %v894 = vmax.f32 %v878, 0.0
  %v895 = vmax.f32 %v879, 0.0
  %v896 = vmax.f32 %v880, 0.0
  %v897 = vmax.f32 %v881, 0.0
  %v898 = vmax.f32 %v882, 0.0
  %v899 = vmax.f32 %v883, 0.0
  %v900 = vmax.f32 %v884, 0.0
  %v901 = vmax.f32 %v885, 0.0
  %v902 = vmax.f32 %v886, 0.0
  %v903 = vmax.f32 %v887, 0.0
  %v904 = vmax.f32 %v888, 0.0
  %v905 = vmax.f32 %v889, 0.0
  %v906 = vadd.s32 %v348, 8
  %v907 = vld [vmem:[%s5] sm:$0x1]
  %v908 = vlaneseq
  %v909 = vshrl.u32 %v908, 7
  %v910 = vsub.s32 0, %v909
  %v911 = vrot.slane %v907, %v910
  %vm912 = vcmp.lt.s32.totalorder %v348, %v911
  %vm913 = vcmp.lt.s32.totalorder %v906, %v911
  %v914 = vsel %vm912, 1, 0
  %v915 = vsel %vm913, 1, 0
  %vm916 = vcmp.eq.s32.totalorder %v914, 1
  %vm917 = vcmp.eq.s32.totalorder %v915, 1
  %v918 = vsel %vm916, %v890, 0.0
  %v919 = vsel %vm917, %v891, 0.0
  %v920 = vsel %vm916, %v892, 0.0
  %v921 = vsel %vm917, %v893, 0.0
  %v922 = vsel %vm916, %v894, 0.0
  %v923 = vsel %vm917, %v895, 0.0
  %v924 = vsel %vm916, %v896, 0.0
  %v925 = vsel %vm917, %v897, 0.0
  %v926 = vsel %vm916, %v898, 0.0
  %v927 = vsel %vm917, %v899, 0.0
  %v928 = vsel %vm916, %v900, 0.0
  %v929 = vsel %vm917, %v901, 0.0
  %v930 = vsel %vm916, %v902, 0.0
  %v931 = vsel %vm917, %v903, 0.0
  %v932 = vsel %vm916, %v904, 0.0
  %v933 = vsel %vm917, %v905, 0.0
  %v934 = vsel %vm658, %v918, -inf
  %v935 = vsel %vm658, %v919, -inf
  %v936 = vmax.f32 %v934, %v935
  %v937 = vrot.slane %v936, 4
  %v938 = vmax.f32 %v936, %v937
  %v939 = vrot.slane %v938, 2
  %v940 = vmax.f32 %v938, %v939
  %v941 = vrot.slane %v940, 1
  %v942 = vmax.f32 %v940, %v941
  %v943 = vsel %vm658, %v920, -inf
  %v944 = vsel %vm658, %v921, -inf
  %v945 = vmax.f32 %v943, %v944
  %v946 = vrot.slane %v945, 4
  %v947 = vmax.f32 %v945, %v946
  %v948 = vrot.slane %v947, 2
  %v949 = vmax.f32 %v947, %v948
  %v950 = vrot.slane %v949, 1
  %v951 = vmax.f32 %v949, %v950
  %v952 = vsel %vm658, %v922, -inf
  %v953 = vsel %vm658, %v923, -inf
  %v954 = vmax.f32 %v952, %v953
  %v955 = vrot.slane %v954, 4
  %v956 = vmax.f32 %v954, %v955
  %v957 = vrot.slane %v956, 2
  %v958 = vmax.f32 %v956, %v957
  %v959 = vrot.slane %v958, 1
  %v960 = vmax.f32 %v958, %v959
  %v961 = vsel %vm658, %v924, -inf
  %v962 = vsel %vm658, %v925, -inf
  %v963 = vmax.f32 %v961, %v962
  %v964 = vrot.slane %v963, 4
  %v965 = vmax.f32 %v963, %v964
  %v966 = vrot.slane %v965, 2
  %v967 = vmax.f32 %v965, %v966
  %v968 = vrot.slane %v967, 1
  %v969 = vmax.f32 %v967, %v968
  %v970 = vsel %vm658, %v926, -inf
  %v971 = vsel %vm658, %v927, -inf
  %v972 = vmax.f32 %v970, %v971
  %v973 = vrot.slane %v972, 4
  %v974 = vmax.f32 %v972, %v973
  %v975 = vrot.slane %v974, 2
  %v976 = vmax.f32 %v974, %v975
  %v977 = vrot.slane %v976, 1
  %v978 = vmax.f32 %v976, %v977
  %v979 = vsel %vm658, %v928, -inf
  %v980 = vsel %vm658, %v929, -inf
  %v981 = vmax.f32 %v979, %v980
  %v982 = vrot.slane %v981, 4
  %v983 = vmax.f32 %v981, %v982
  %v984 = vrot.slane %v983, 2
  %v985 = vmax.f32 %v983, %v984
  %v986 = vrot.slane %v985, 1
  %v987 = vmax.f32 %v985, %v986
  %v988 = vsel %vm658, %v930, -inf
  %v989 = vsel %vm658, %v931, -inf
  %v990 = vmax.f32 %v988, %v989
  %v991 = vrot.slane %v990, 4
  %v992 = vmax.f32 %v990, %v991
  %v993 = vrot.slane %v992, 2
  %v994 = vmax.f32 %v992, %v993
  %v995 = vrot.slane %v994, 1
  %v996 = vmax.f32 %v994, %v995
  %v997 = vsel %vm658, %v932, -inf
  %v998 = vsel %vm658, %v933, -inf
  %v999 = vmax.f32 %v997, %v998
  %v1000 = vrot.slane %v999, 4
  %v1001 = vmax.f32 %v999, %v1000
  %v1002 = vrot.slane %v1001, 2
  %v1003 = vmax.f32 %v1001, %v1002
  %v1004 = vrot.slane %v1003, 1
  %v1005 = vmax.f32 %v1003, %v1004
  %v1006 = vpack.c.bf16 %v942, %v942
  %v1007 = vpack.c.bf16 %v951, %v951
  %v1008 = vpack.c.bf16 %v960, %v960
  %v1009 = vpack.c.bf16 %v969, %v969
  %v1010 = vpack.c.bf16 %v978, %v978
  %v1011 = vpack.c.bf16 %v987, %v987
  %v1012 = vpack.c.bf16 %v996, %v996
  %v1013 = vpack.c.bf16 %v1005, %v1005
  %v1014 = vld [vmem:[%s6] sm:$0xf]
  %v1015 = vld [vmem:[%s6 + $0x4] sm:$0xf]
  %v1016 = vld [vmem:[%s6 + $0x8] sm:$0xf]
  %v1017 = vld [vmem:[%s6 + $0xc] sm:$0xf]
  %v1018 = vld [vmem:[%s6 + $0x10] sm:$0xf]
  %v1019 = vld [vmem:[%s6 + $0x14] sm:$0xf]
  %v1020 = vld [vmem:[%s6 + $0x18] sm:$0xf]
  %v1021 = vld [vmem:[%s6 + $0x1c] sm:$0xf]
  %v1022 = vld [vmem:[%s6 + $0x20] sm:$0xf]
  %v1023 = vld [vmem:[%s6 + $0x24] sm:$0xf]
  %v1024 = vld [vmem:[%s6 + $0x28] sm:$0xf]
  %v1025 = vld [vmem:[%s6 + $0x2c] sm:$0xf]
  %v1026 = vld [vmem:[%s7] sm:$0x1]
  %v1028 = vlaneseq
  %v1029 = vshrl.u32 %v1028, 7
  %v1030 = vsub.s32 0, %v1029
  %v1031 = vrot.slane %v1026, %v1030
  %v1041 = vunpack.c.l.b16 %v1006
  %v1042 = vunpack.c.l.b16 %v1007
  %v1043 = vunpack.c.l.b16 %v1008
  %v1044 = vunpack.c.l.b16 %v1009
  %v1045 = vunpack.c.l.b16 %v1010
  %v1046 = vunpack.c.l.b16 %v1011
  %v1047 = vunpack.c.l.b16 %v1012
  %v1048 = vunpack.c.l.b16 %v1013
  %vm1049 = vcmask 1041409
  %v1050 = vsel %vm1049, %v1042, %v1041
  %vm1051 = vcmask 1042434
  %v1052 = vsel %vm1051, %v1043, %v1050
  %vm1053 = vcmask 1043459
  %v1054 = vsel %vm1053, %v1044, %v1052
  %vm1055 = vcmask 1044484
  %v1056 = vsel %vm1055, %v1045, %v1054
  %vm1057 = vcmask 1045509
  %v1058 = vsel %vm1057, %v1046, %v1056
  %vm1059 = vcmask 1046534
  %v1060 = vsel %vm1059, %v1047, %v1058
  %vm1061 = vcmask 1047559
  %v1062 = vsel %vm1061, %v1048, %v1060
  %v1063 = vpack.c.b16 %v1062, %v1062
  %v1076 = vunpack.c.l.b16 %v1014
  %v1077 = vunpack.c.l.b16 %v1015
  %v1078 = vunpack.c.l.b16 %v1016
  %v1079 = vunpack.c.l.b16 %v1017
  %v1080 = vunpack.c.l.b16 %v1018
  %v1081 = vunpack.c.l.b16 %v1019
  %v1082 = vunpack.c.l.b16 %v1020
  %v1083 = vunpack.c.l.b16 %v1021
  %v1084 = vunpack.c.l.b16 %v1022
  %v1085 = vunpack.c.l.b16 %v1023
  %v1086 = vunpack.c.l.b16 %v1024
  %v1087 = vunpack.c.l.b16 %v1025
  %v1088 = vpack.c.b16 %v1077, %v1076
  %v1089 = vpack.c.b16 %v1079, %v1078
  %v1090 = vpack.c.b16 %v1081, %v1080
  %v1091 = vpack.c.b16 %v1083, %v1082
  %v1092 = vpack.c.b16 %v1085, %v1084
  %v1093 = vpack.c.b16 %v1087, %v1086
  %v1101 = vsel %vm658, %v1063, 0
  %1103 = vmatprep.subr.bf16.mxu0 0
  %1104 = vmatpush1.bf16.msra.mxu0 %v1088
  %1105 = vmatprep.subr.bf16.mxu0 0
  %1106 = vmatpush1.bf16.msra.mxu0 %v1089
  %1107 = vmatprep.subr.bf16.mxu0 0
  %1108 = vmatpush1.bf16.msra.mxu0 %v1090
  %1109 = vmatprep.subr.bf16.mxu0 0
  %1110 = vmatpush1.bf16.msra.mxu0 %v1091
  %1111 = vmatprep.subr.bf16.mxu0 0
  %1112 = vmatpush1.bf16.msra.mxu0 %v1092
  %1113 = vmatprep.subr.bf16.mxu0 0
  %1114 = vmatpush1.bf16.msra.mxu0 %v1093
  %1115 = vmatprep.subr.bf16.mxu0 0
  %1116 = vmatpush1.bf16.msra.mxu0 0
  %1117 = vmatprep.subr.bf16.mxu0 0
  %1118 = vmatpush1.bf16.msra.mxu0 0
  %1119 = vmatprep.subr.bf16.mxu0 0
  %1120 = vmatpush1.bf16.msra.mxu0 0
  %1121 = vmatprep.subr.bf16.mxu0 0
  %1122 = vmatpush1.bf16.msra.mxu0 0
  %1123 = vmatprep.subr.bf16.mxu0 0
  %1124 = vmatpush1.bf16.msra.mxu0 0
  %1125 = vmatprep.subr.bf16.mxu0 0
  %1126 = vmatpush1.bf16.msra.mxu0 0
  %1127 = vmatprep.subr.bf16.mxu0 0
  %1128 = vmatpush1.bf16.msra.mxu0 0
  %1129 = vmatprep.subr.bf16.mxu0 0
  %1130 = vmatpush1.bf16.msra.mxu0 0
  %1131 = vmatprep.subr.bf16.mxu0 0
  %1132 = vmatpush1.bf16.msra.mxu0 0
  %1133 = vmatprep.subr.bf16.mxu0 0
  %1134 = vmatpush1.bf16.msra.mxu0 0
  %1135 = vmatprep.mubr.bf16.mxu0 0
  %1136 = vmatmul.mubr.bf16.gmra.mrb[0].mxu0 %v1101
  %v1137 = vpop.f32.mrb[0].mxu0
  %v1138 = vadd.f32 %v1031, %v1137
  %v1139 = vpop.f32.mrb[0].mxu0
  %v1140 = vpop.f32.mrb[0].mxu0
  %v1141 = vpop.f32.mrb[0].mxu0
  %1142 = vdwg.mxu0
  %vm1143 = vcmp.lt.s32.totalorder %v32, 8
  %v1144 = vsel %vm1143, %v1138, -1e+30
  %1145 = vmax.xlane.f32.xlu0 %v1144
  %v1146 = vpop.xlane.xlu0 %1145
  %v1147 = vsub.f32 %v1144, %v1146
  %v1148 = vmul.f32 %v1147, 1.442695
  %v1149 = vpow.pop %v1148
  %1150 = vadd.xlane.f32.xlu0 %v1149
  %v1151 = vpop.xlane.xlu0 %1150
  %v1152 = vlog2.pop %v1151
  %v1153 = vmul.f32 %v1152, 0.6931472
  %v1154 = vadd.f32 %v1146, %v1153
  %v1155 = vsub.f32 %v1144, %v1154
  %1156 = vst [vmem:[%s8] sm:$0xff] %v1155
  // Predicated region
  $region34: #{net_cnn_forward.1} parent=0 // pred_check
    _
  $region35: #{net_cnn_forward.1} parent=0 // pred_check_branch
    %1158 = sbr.rel (0) target = $region37
  $region36: #{net_cnn_forward.1} parent=0 // pred_region
    _
  $region37: #{net_cnn_forward.1} parent=0 // pred_fallthru
    _
  // Predicated region
  $region38: #{net_cnn_forward.1} parent=0 // pred_check
    _
  $region39: #{net_cnn_forward.1} parent=0 // pred_check_branch
    %1160 = sbr.rel (0) target = $region41
  $region40: #{net_cnn_forward.1} parent=0 // pred_region
    _
  $region41: #{net_cnn_forward.1} parent=0 // pred_fallthru
    _

</llo_original>
